<compile_context>
chip_gen: v7x
topology: tpu7x:2x2x1
jax: 0.10.0
libtpu: 0.0.40
codegen_flags: <defaults>
</compile_context>

<pallas_src>
import functools
import math

import jax
import jax.numpy as jnp
from jax.experimental import pallas as pl
from jax.experimental.pallas import tpu as pltpu

OMEGA_0 = 30.0
_LANE = 128
_SUBLANE = 8


def _round_up(x, m):
    return ((x + m - 1) // m) * m


# ---------------------------------------------------------------------------
# Pallas kernel: fused (Linear -> sin) chain + final Linear
# ---------------------------------------------------------------------------
def _sinmlp_kernel(*refs, num_layers, sine_scale, small_k_first):
    x_ref = refs[0]
    out_ref = refs[-1]
    param_refs = refs[1:-1]          # [w0, b0, w1, b1, ..., wL, bL]

    h = x_ref[...].astype(jnp.float32)
    for i in range(num_layers):
        w = param_refs[2 * i][...]           # (in_f, out_f)   f32 or bf16
        b = param_refs[2 * i + 1][...]       # (1, out_f)      f32

        if i == 0 and small_k_first and w.dtype == jnp.float32:
            # Tiny contraction depth (K <= 8, e.g. 2-D coordinates): do the
            # first layer as VPU outer-product multiply-adds instead of paying
            # MXU push + result-FIFO pop latency for a K=2 matmul.
            acc = b
            for k in range(w.shape[0]):
                acc = acc + h[:, k:k + 1] * w[k:k + 1, :]
            h = acc
        else:
            h_in = h.astype(w.dtype) if w.dtype != jnp.float32 else h
            h = jnp.dot(h_in, w, preferred_element_type=jnp.float32) + b

        if i < num_layers - 1:               # all but last layer are SineLayers
            # omega_0 is folded into W/b on the host when sine_scale == 1.0.
            h = jnp.sin(h) if sine_scale == 1.0 else jnp.sin(sine_scale * h)
            # TODO(synk): on v5e (single vst slot) casting this inter-layer
            # slab to bf16 can relieve a vst-bound profile; kept f32 here.

    out_ref[...] = h.astype(out_ref.dtype)


# ---------------------------------------------------------------------------
# Wrapper
# ---------------------------------------------------------------------------
def sinmlp_forward(x, params, *, tile_m=512, use_bf16_matmul=None,
                   fold_omega=True, pad_out_lanes=None, weight_buffering=None,
                   omega_0=OMEGA_0):
    """params: list of (W:(in_f,out_f), b:(out_f,)) per layer (last = plain linear)."""
    lead_shape = x.shape[:-1]
    in_dim = x.shape[-1]
    xf = x.reshape(-1, in_dim)
    n = xf.shape[0]

    num_layers = len(params)
    out_dim = int(params[-1][0].shape[1])
    max_width = max(int(w.shape[1]) for w, _ in params)

    # --- Row tile ------------------------------------------------------------
    # Big tiles amortize the ~0.35us per-grid-step overhead, but keep >= 2 grid
    # steps whenever possible so the "parallel" axis can shard across the two
    # v7x TensorCores (costs one extra cheap step on single-TC v5e/v6e).
    # TODO(synk): sweep tile_m per generation (256-512 v5e, 512-2048 v6e,
    # 512-1024 v7x) for the last 5-15%.
    tile_m = max(_SUBLANE, min(_round_up(tile_m, _SUBLANE), _round_up(n, _SUBLANE)))
    if n > _SUBLANE:
        tile_m = min(tile_m, _round_up(pl.cdiv(n, 2), _SUBLANE))
    grid_m = pl.cdiv(n, tile_m)

    # --- Precision policy ----------------------------------------------------
    if use_bf16_matmul is None:
        hidden_widths = [int(w.shape[1]) for w, _ in params[:-1]]
        # Only worth the rounding for reasonably wide hidden layers.
        use_bf16_matmul = bool(hidden_widths) and min(hidden_widths) >= 256

    # --- Output lane padding: only when it is nearly free --------------------
    if pad_out_lanes is None:
        padded = _round_up(out_dim, _LANE)
        # Pad only if extra writeback <= ~12.5%; for out_dim=3 padding to 128
        # would inflate HBM writeback ~42x (plus a second full-slab slice pass).
        pad_out_lanes = (out_dim % _LANE != 0) and (padded * 8 <= out_dim * 9)
    out_dim_p = _round_up(out_dim, _LANE) if pad_out_lanes else out_dim

    # --- Parameter prep (fold omega, pad last layer, optional bf16) ----------
    flat_params = []
    for li, (w, b) in enumerate(params):
        w = jnp.asarray(w, jnp.float32)
        b = jnp.asarray(b, jnp.float32)
        is_sine = li < num_layers - 1
        if is_sine and fold_omega:
            # sin(omega0*(x@W + b)) == sin(x@(omega0*W) + omega0*b):
            # removes one vmul per element on the VALU-bound sine layers.
            w = w * omega_0
            b = b * omega_0
        if li == num_layers - 1 and out_dim_p != out_dim:
            w = jnp.pad(w, ((0, 0), (0, out_dim_p - out_dim)))
            b = jnp.pad(b, ((0, out_dim_p - out_dim),))
        if use_bf16_matmul and 0 < li < num_layers - 1:
            # First layer stays f32 (sin(30*h) amplifies input error) and the
            # final linear stays f32 for output precision; hidden layers use
            # bf16 MXU operands with f32 accumulation.
            w = w.astype(jnp.bfloat16)
        flat_params.append(w)
        flat_params.append(b.reshape(1, -1))

    param_bytes = sum(int(p.size) * p.dtype.itemsize for p in flat_params)

    # --- Weight buffering: single-buffer big constant-index operands ---------
    if weight_buffering is None:
        # Only engage Buffered(1) when the VMEM saving actually matters; tiny
        # nets keep the plain (default) spec for maximum robustness.
        weight_buffering = 1 if param_bytes >= (8 << 20) else 2
    weight_spec_kwargs = {}
    if weight_buffering != 2:
        weight_spec_kwargs = dict(pipeline_mode=pl.Buffered(weight_buffering))

    in_specs = [pl.BlockSpec((tile_m, in_dim), lambda i: (i, 0))]
    for p in flat_params:
        # Constant block index: DMA'd once, resident across all grid steps.
        in_specs.append(pl.BlockSpec(p.shape, lambda i: (0, 0), **weight_spec_kwargs))

    # --- Explicit VMEM budget (default scoped limit is only 16/32 MiB) -------
    act_bytes = 2 * tile_m * max(max_width, in_dim) * 4          # layer-to-layer slabs
    io_bytes = 2 * tile_m * (in_dim * xf.dtype.itemsize          # double-buffered x tile
                             + out_dim_p * x.dtype.itemsize)     # double-buffered out tile
    vmem_need = weight_buffering * param_bytes + io_bytes + act_bytes
    vmem_limit = int(min(100 << 20, max(32 << 20, int(vmem_need * 1.5))))

    # --- Advisory cost estimate (consistent with the actual output bytes) ----
    flops = 2 * n * sum(int(w.shape[0]) * int(w.shape[1]) for w, _ in params)
    transcendentals = n * sum(int(w.shape[1]) for w, _ in params[:-1])
    bytes_accessed = (xf.size * xf.dtype.itemsize
                      + param_bytes
                      + n * out_dim_p * x.dtype.itemsize)

    kernel = functools.partial(
        _sinmlp_kernel,
        num_layers=num_layers,
        sine_scale=1.0 if fold_omega else float(omega_0),
        small_k_first=in_dim <= 8,
    )

    out = pl.pallas_call(
        kernel,
        out_shape=jax.ShapeDtypeStruct((n, out_dim_p), x.dtype),
        grid=(grid_m,),
        in_specs=in_specs,
        out_specs=pl.BlockSpec((tile_m, out_dim_p), lambda i: (i, 0)),
        compiler_params=pltpu.CompilerParams(
            dimension_semantics=("parallel",),   # megacore sharding on v7x
            vmem_limit_bytes=vmem_limit,
        ),
        cost_estimate=pl.CostEstimate(
            flops=flops,
            transcendentals=transcendentals,
            bytes_accessed=bytes_accessed,
        ),
    )(xf, *flat_params)

    if out_dim_p != out_dim:
        out = out[:, :out_dim]
    return out.reshape(*lead_shape, out_dim)


# ---------------------------------------------------------------------------
# Deterministic parameter init (mirrors SineLayer / nn.Linear init schemes)
# ---------------------------------------------------------------------------
def init_sinmlp_params(key, in_dim, out_dim, hidden_list):
    # Layer plan exactly as SinMLP.__init__:
    #   SineLayer(in_dim, hidden_list[0], is_first=True)
    #   SineLayer(h, h) for every h in hidden_list
    #   nn.Linear(hidden_list[0], out_dim)
    layer_dims = [(in_dim, hidden_list[0], "sine_first")]
    for h in hidden_list:
        layer_dims.append((h, h, "sine"))
    layer_dims.append((hidden_list[0], out_dim, "linear"))

    params = []
    keys = jax.random.split(key, 2 * len(layer_dims))
    for li, (fin, fout, kind) in enumerate(layer_dims):
        wk, bk = keys[2 * li], keys[2 * li + 1]
        if kind == "sine_first":
            w_bound = 1.0 / fin
        elif kind == "sine":
            w_bound = math.sqrt(6.0 / fin) / OMEGA_0
        else:  # default nn.Linear weight init
            w_bound = 1.0 / math.sqrt(fin)
        b_bound = 1.0 / math.sqrt(fin)  # default nn.Linear bias init
        w = jax.random.uniform(wk, (fin, fout), jnp.float32, -w_bound, w_bound)
        b = jax.random.uniform(bk, (fout,), jnp.float32, -b_bound, b_bound)
        params.append((w, b))
    return params


# ---------------------------------------------------------------------------
# Pure-JAX reference (exact PyTorch semantics: unfolded omega, f32 everywhere)
# ---------------------------------------------------------------------------
def sinmlp_ref(x, params, omega_0=OMEGA_0):
    lead_shape = x.shape[:-1]
    h = x.reshape(-1, x.shape[-1])
    for i, (w, b) in enumerate(params):
        h = h @ w + b
        if i < len(params) - 1:
            h = jnp.sin(omega_0 * h)
    return h.reshape(*lead_shape, -1)


if __name__ == "__main__":
    key = jax.random.PRNGKey(0)
    k_x, k_p, k_x2 = jax.random.split(key, 3)

    in_dim, out_dim = 2, 3
    hidden_list = [32, 32]
    params = init_sinmlp_params(k_p, in_dim, out_dim, hidden_list)

    # Case 1: small batch of coordinates (n = 32 rows), default (omega-folded) path.
    x = jax.random.uniform(k_x, (4, 8, in_dim), jnp.float32, -1.0, 1.0)
    out = jax.block_until_ready(sinmlp_forward(x, params))
    ref = sinmlp_ref(x, params)
    assert out.shape == (4, 8, out_dim), out.shape
    err = float(jnp.max(jnp.abs(out - ref)))
    assert err < 1e-4, err

    # Case 2: ragged row count (n = 35), multi-step grid (tile_m = 16), exact
    # (unfolded) f32 path — exercises the no-host-pad partial tail block.
    x2 = jax.random.uniform(k_x2, (7, 5, in_dim), jnp.float32, -1.0, 1.0)
    out2 = jax.block_until_ready(
        sinmlp_forward(x2, params, tile_m=16, fold_omega=False))
    ref2 = sinmlp_ref(x2, params)
    assert out2.shape == (7, 5, out_dim), out2.shape
    err2 = float(jnp.max(jnp.abs(out2 - ref2)))
    assert err2 < 1e-4, err2

    print("KERNEL_OK")
</pallas_src>

<mosaic_0001>
module attributes {stable_mosaic.version = 11 : i64} {
  func.func @_sinmlp_kernel(%arg0: i32, %arg1: memref<16x2xf32, #tpu.memory_space<vmem>>, %arg2: memref<2x32xf32, #tpu.memory_space<vmem>>, %arg3: memref<1x32xf32, #tpu.memory_space<vmem>>, %arg4: memref<32x32xf32, #tpu.memory_space<vmem>>, %arg5: memref<1x32xf32, #tpu.memory_space<vmem>>, %arg6: memref<32x32xf32, #tpu.memory_space<vmem>>, %arg7: memref<1x32xf32, #tpu.memory_space<vmem>>, %arg8: memref<32x3xf32, #tpu.memory_space<vmem>>, %arg9: memref<1x3xf32, #tpu.memory_space<vmem>>, %arg10: memref<16x3xf32, #tpu.memory_space<vmem>>) attributes {dimension_semantics = [#tpu.dimension_semantics<parallel>], iteration_bounds = array<i64: 2>, scalar_prefetch = 0 : i64, scratch_operands = 0 : i64, tpu.core_type = #tpu.core_type<tc>, window_params = [{transform_indices = @transform_0, window_bounds = array<i64: 16, 2>}, {pipeline_mode = #tpu.pipeline_mode<synchronous>, transform_indices = @transform_1, window_bounds = array<i64: 2, 32>}, {pipeline_mode = #tpu.pipeline_mode<synchronous>, transform_indices = @transform_2, window_bounds = array<i64: 1, 32>}, {pipeline_mode = #tpu.pipeline_mode<synchronous>, transform_indices = @transform_3, window_bounds = array<i64: 32, 32>}, {pipeline_mode = #tpu.pipeline_mode<synchronous>, transform_indices = @transform_4, window_bounds = array<i64: 1, 32>}, {pipeline_mode = #tpu.pipeline_mode<synchronous>, transform_indices = @transform_5, window_bounds = array<i64: 32, 32>}, {pipeline_mode = #tpu.pipeline_mode<synchronous>, transform_indices = @transform_6, window_bounds = array<i64: 1, 32>}, {pipeline_mode = #tpu.pipeline_mode<synchronous>, transform_indices = @transform_7, window_bounds = array<i64: 32, 3>}, {pipeline_mode = #tpu.pipeline_mode<synchronous>, transform_indices = @transform_8, window_bounds = array<i64: 1, 3>}, {transform_indices = @transform_9, window_bounds = array<i64: 16, 3>}]} {
    %c0 = arith.constant 0 : index
    %c0_0 = arith.constant 0 : index
    %0 = vector.load %arg1[%c0, %c0_0] : memref<16x2xf32, #tpu.memory_space<vmem>>, vector<16x2xf32>
    %c0_1 = arith.constant 0 : index
    %c0_2 = arith.constant 0 : index
    %1 = vector.load %arg2[%c0_1, %c0_2] : memref<2x32xf32, #tpu.memory_space<vmem>>, vector<2x32xf32>
    %c0_3 = arith.constant 0 : index
    %c0_4 = arith.constant 0 : index
    %2 = vector.load %arg3[%c0_3, %c0_4] : memref<1x32xf32, #tpu.memory_space<vmem>>, vector<1x32xf32>
    %3 = vector.extract_strided_slice %0 {offsets = [0, 0], sizes = [16, 1], strides = [1, 1]} : vector<16x2xf32> to vector<16x1xf32>
    %4 = vector.extract_strided_slice %1 {offsets = [0, 0], sizes = [1, 32], strides = [1, 1]} : vector<2x32xf32> to vector<1x32xf32>
    %5 = vector.broadcast %3 : vector<16x1xf32> to vector<16x32xf32>
    %6 = vector.broadcast %4 : vector<1x32xf32> to vector<16x32xf32>
    %7 = arith.mulf %5, %6 : vector<16x32xf32>
    %8 = vector.broadcast %2 : vector<1x32xf32> to vector<16x32xf32>
    %9 = arith.addf %8, %7 : vector<16x32xf32>
    %10 = vector.extract_strided_slice %0 {offsets = [0, 1], sizes = [16, 1], strides = [1, 1]} : vector<16x2xf32> to vector<16x1xf32>
    %11 = vector.extract_strided_slice %1 {offsets = [1, 0], sizes = [1, 32], strides = [1, 1]} : vector<2x32xf32> to vector<1x32xf32>
    %12 = vector.broadcast %10 : vector<16x1xf32> to vector<16x32xf32>
    %13 = vector.broadcast %11 : vector<1x32xf32> to vector<16x32xf32>
    %14 = arith.mulf %12, %13 : vector<16x32xf32>
    %15 = arith.addf %9, %14 : vector<16x32xf32>
    %16 = math.sin %15 : vector<16x32xf32>
    %c0_5 = arith.constant 0 : index
    %c0_6 = arith.constant 0 : index
    %17 = vector.load %arg4[%c0_5, %c0_6] : memref<32x32xf32, #tpu.memory_space<vmem>>, vector<32x32xf32>
    %c0_7 = arith.constant 0 : index
    %c0_8 = arith.constant 0 : index
    %18 = vector.load %arg5[%c0_7, %c0_8] : memref<1x32xf32, #tpu.memory_space<vmem>>, vector<1x32xf32>
    %cst = arith.constant dense<0.000000e+00> : vector<16x32xf32>
    %19 = tpu.matmul %16, %17, %cst {dimension_numbers = #tpu.dot_dimension_numbers<[1], [0], [0], [1], [0, 0, 1, 1], [], []>} : vector<16x32xf32>, vector<32x32xf32>, vector<16x32xf32> -> vector<16x32xf32>
    %20 = vector.broadcast %18 : vector<1x32xf32> to vector<16x32xf32>
    %21 = arith.addf %19, %20 : vector<16x32xf32>
    %22 = math.sin %21 : vector<16x32xf32>
    %c0_9 = arith.constant 0 : index
    %c0_10 = arith.constant 0 : index
    %23 = vector.load %arg6[%c0_9, %c0_10] : memref<32x32xf32, #tpu.memory_space<vmem>>, vector<32x32xf32>
    %c0_11 = arith.constant 0 : index
    %c0_12 = arith.constant 0 : index
    %24 = vector.load %arg7[%c0_11, %c0_12] : memref<1x32xf32, #tpu.memory_space<vmem>>, vector<1x32xf32>
    %cst_13 = arith.constant dense<0.000000e+00> : vector<16x32xf32>
    %25 = tpu.matmul %22, %23, %cst_13 {dimension_numbers = #tpu.dot_dimension_numbers<[1], [0], [0], [1], [0, 0, 1, 1], [], []>} : vector<16x32xf32>, vector<32x32xf32>, vector<16x32xf32> -> vector<16x32xf32>
    %26 = vector.broadcast %24 : vector<1x32xf32> to vector<16x32xf32>
    %27 = arith.addf %25, %26 : vector<16x32xf32>
    %28 = math.sin %27 : vector<16x32xf32>
    %c0_14 = arith.constant 0 : index
    %c0_15 = arith.constant 0 : index
    %29 = vector.load %arg8[%c0_14, %c0_15] : memref<32x3xf32, #tpu.memory_space<vmem>>, vector<32x3xf32>
    %c0_16 = arith.constant 0 : index
    %c0_17 = arith.constant 0 : index
    %30 = vector.load %arg9[%c0_16, %c0_17] : memref<1x3xf32, #tpu.memory_space<vmem>>, vector<1x3xf32>
    %cst_18 = arith.constant dense<0.000000e+00> : vector<16x3xf32>
    %31 = tpu.matmul %28, %29, %cst_18 {dimension_numbers = #tpu.dot_dimension_numbers<[1], [0], [0], [1], [0, 0, 1, 1], [], []>} : vector<16x32xf32>, vector<32x3xf32>, vector<16x3xf32> -> vector<16x3xf32>
    %32 = vector.broadcast %30 : vector<1x3xf32> to vector<16x3xf32>
    %33 = arith.addf %31, %32 : vector<16x3xf32>
    %c0_19 = arith.constant 0 : index
    %c0_20 = arith.constant 0 : index
    %34 = vector.load %arg10[%c0_19, %c0_20] : memref<16x3xf32, #tpu.memory_space<vmem>>, vector<16x3xf32>
    tpu.vector_store %arg10[%c0_19, %c0_20], %33 {strides = array<i32>} : memref<16x3xf32, #tpu.memory_space<vmem>>, vector<16x3xf32>,
    return
  }
  func.func @transform_0(%arg0: i32) -> (i32, i32) {
    %c0_i32 = arith.constant 0 : i32
    %c0_i32_0 = arith.constant 0 : i32
    return %arg0, %c0_i32 : i32, i32
  }
  func.func @transform_1(%arg0: i32) -> (i32, i32) {
    %c0_i32 = arith.constant 0 : i32
    %c0_i32_0 = arith.constant 0 : i32
    %c0_i32_1 = arith.constant 0 : i32
    return %c0_i32, %c0_i32_0 : i32, i32
  }
  func.func @transform_2(%arg0: i32) -> (i32, i32) {
    %c0_i32 = arith.constant 0 : i32
    %c0_i32_0 = arith.constant 0 : i32
    %c0_i32_1 = arith.constant 0 : i32
    return %c0_i32, %c0_i32_0 : i32, i32
  }
  func.func @transform_3(%arg0: i32) -> (i32, i32) {
    %c0_i32 = arith.constant 0 : i32
    %c0_i32_0 = arith.constant 0 : i32
    %c0_i32_1 = arith.constant 0 : i32
    return %c0_i32, %c0_i32_0 : i32, i32
  }
  func.func @transform_4(%arg0: i32) -> (i32, i32) {
    %c0_i32 = arith.constant 0 : i32
    %c0_i32_0 = arith.constant 0 : i32
    %c0_i32_1 = arith.constant 0 : i32
    return %c0_i32, %c0_i32_0 : i32, i32
  }
  func.func @transform_5(%arg0: i32) -> (i32, i32) {
    %c0_i32 = arith.constant 0 : i32
    %c0_i32_0 = arith.constant 0 : i32
    %c0_i32_1 = arith.constant 0 : i32
    return %c0_i32, %c0_i32_0 : i32, i32
  }
  func.func @transform_6(%arg0: i32) -> (i32, i32) {
    %c0_i32 = arith.constant 0 : i32
    %c0_i32_0 = arith.constant 0 : i32
    %c0_i32_1 = arith.constant 0 : i32
    return %c0_i32, %c0_i32_0 : i32, i32
  }
  func.func @transform_7(%arg0: i32) -> (i32, i32) {
    %c0_i32 = arith.constant 0 : i32
    %c0_i32_0 = arith.constant 0 : i32
    %c0_i32_1 = arith.constant 0 : i32
    return %c0_i32, %c0_i32_0 : i32, i32
  }
  func.func @transform_8(%arg0: i32) -> (i32, i32) {
    %c0_i32 = arith.constant 0 : i32
    %c0_i32_0 = arith.constant 0 : i32
    %c0_i32_1 = arith.constant 0 : i32
    return %c0_i32, %c0_i32_0 : i32, i32
  }
  func.func @transform_9(%arg0: i32) -> (i32, i32) {
    %c0_i32 = arith.constant 0 : i32
    %c0_i32_0 = arith.constant 0 : i32
    return %arg0, %c0_i32 : i32, i32
  }
}

</mosaic_0001>

<llo_original>
// kernel: tpu_custom_call.1
$region0: #{tpu_custom_call.1}
  #allocation0 [shape = 'u32[]', space=smem, size = 0x4, offset = 0x4, fixed_abs, tag = 'smem constant byte address 0x4 - core index']
  #allocation1 [shape = 'u32[144,128]{1,0:T(1,128)}', space=vmem, size = 0x12000, scoped, tag = 'internal scratch']
  %s0 = inlined_call_operand.vmem [shape: f32[32,2], index: 0, kind: input, shape index: {}]
  %s1 = inlined_call_operand.vmem [shape: f32[2,32], index: 1, kind: input, shape index: {}]
  %s2 = inlined_call_operand.vmem [shape: f32[1,32], index: 2, kind: input, shape index: {}]
  %s3 = inlined_call_operand.vmem [shape: f32[32,32], index: 3, kind: input, shape index: {}]
  %s4 = inlined_call_operand.vmem [shape: f32[1,32], index: 4, kind: input, shape index: {}]
  %s5 = inlined_call_operand.vmem [shape: f32[32,32], index: 5, kind: input, shape index: {}]
  %s6 = inlined_call_operand.vmem [shape: f32[1,32], index: 6, kind: input, shape index: {}]
  %s7 = inlined_call_operand.vmem [shape: f32[32,3], index: 7, kind: input, shape index: {}]
  %s8 = inlined_call_operand.vmem [shape: f32[1,3], index: 8, kind: input, shape index: {}]
  %s9 = inlined_call_operand.vmem [shape: f32[32,3], index: 9, kind: output, shape index: {}]
  %s10 = sld [smem:[#allocation0]]
  $region69: #{tpu_custom_call.1} parent=0
    _
  %s12 = ssub.s32 1, %s10
  %s13 = scalar_select 0, %s12, %s10
  loop: start=0, step=1, limit=4
  $region2: #{tpu_custom_call.1} parent=0 // loop_pre_header
    _
  $region3: #{tpu_custom_call.1} parent=0 // loop_header
    %s15 = sphi 0, %s19
    %p16 = scmp.ge.s32.totalorder %s15, 4
    %s25 = sphi 0, %s27
    %s28 = sphi 0, %s25
    %s29 = sphi 0, %s28
    %s45 = sphi 0, %s29
    %s49 = sphi 0, %s49
    %s51 = sphi 0, %s49
    %s52 = sphi 0, %s51
    %s66 = sphi 0, %s52
    %s70 = sphi 0, %s70
    %s72 = sphi 0, %s70
    %s73 = sphi 0, %s72
    %s87 = sphi 0, %s73
    %s91 = sphi 0, %s91
    %s93 = sphi 0, %s91
    %s94 = sphi 0, %s93
    %s108 = sphi 0, %s94
    %s112 = sphi 0, %s112
    %s114 = sphi 0, %s112
    %s115 = sphi 0, %s114
    %s129 = sphi 0, %s115
    %s133 = sphi 0, %s133
    %s135 = sphi 0, %s133
    %s136 = sphi 0, %s135
    %s150 = sphi 0, %s136
    %s154 = sphi 0, %s154
    %s156 = sphi 0, %s154
    %s157 = sphi 0, %s156
    %s171 = sphi 0, %s157
    %s175 = sphi 0, %s175
    %s177 = sphi 0, %s175
    %s178 = sphi 0, %s177
    %s192 = sphi 0, %s178
    %s196 = sphi 0, %s196
    %s198 = sphi 0, %s196
    %s199 = sphi 0, %s198
    %s213 = sphi 0, %s199
    %s219 = sphi 0, %s221
    %s222 = sphi 0, %s219
    %s223 = sphi 0, %s222
    %s239 = sphi 0, %s223
  $region4: #{tpu_custom_call.1} parent=0 // loop_header_branch
    %18 = sbr.rel (%p16) target = $region8
  $region5: #{tpu_custom_call.1} parent=0 // loop_body
    %s20 = ssub.s32 %s15, 1
    %s21 = ssub.s32 %s15, 2
    %s22 = sadd.s32 %s15, 1
    %s23 = ssub.s32 %s15, %s22
    %p24 = scmp.eq.s32.totalorder %s23, 0
    %s26 = sadd.s32 %s25, 1
    %s27 = scalar_select %p24, %s25, %s26
    %p30 = pneg %p24
    %p31 = scmp.eq.s32.totalorder %s15, 1
    %p32 = por %p30, %p31
    %p33 = scmp.ne.s32.totalorder %s25, %s28
    %p34 = scmp.eq.s32.totalorder %s15, 0
    %p35 = por %p33, %p34
    %p36 = scmp.ne.s32.totalorder %s25, %s28
    %p37 = scmp.eq.s32.totalorder %s20, 1
    %p38 = por %p36, %p37
    %p39 = scmp.ne.s32.totalorder %s28, %s29
    %p40 = scmp.eq.s32.totalorder %s20, 0
    %p41 = por %p39, %p40
    %p42 = scmp.ne.s32.totalorder %s28, %s29
    %p43 = scmp.eq.s32.totalorder %s21, 1
    %p44 = por %p42, %p43
    %p46 = scmp.ne.s32.totalorder %s29, %s45
    %p47 = scmp.eq.s32.totalorder %s21, 0
    %p48 = por %p46, %p47
    %s50 = sadd.s32 %s49, 1
    %p53 = scmp.eq.s32.totalorder %s15, 1
    %p54 = scmp.ne.s32.totalorder %s49, %s51
    %p55 = scmp.eq.s32.totalorder %s15, 0
    %p56 = por %p54, %p55
    %p57 = scmp.ne.s32.totalorder %s49, %s51
    %p58 = scmp.eq.s32.totalorder %s20, 1
    %p59 = por %p57, %p58
    %p60 = scmp.ne.s32.totalorder %s51, %s52
    %p61 = scmp.eq.s32.totalorder %s20, 0
    %p62 = por %p60, %p61
    %p63 = scmp.ne.s32.totalorder %s51, %s52
    %p64 = scmp.eq.s32.totalorder %s21, 1
    %p65 = por %p63, %p64
    %p67 = scmp.ne.s32.totalorder %s52, %s66
    %p68 = scmp.eq.s32.totalorder %s21, 0
    %p69 = por %p67, %p68
    %s71 = sadd.s32 %s70, 1
    %p74 = scmp.eq.s32.totalorder %s15, 1
    %p75 = scmp.ne.s32.totalorder %s70, %s72
    %p76 = scmp.eq.s32.totalorder %s15, 0
    %p77 = por %p75, %p76
    %p78 = scmp.ne.s32.totalorder %s70, %s72
    %p79 = scmp.eq.s32.totalorder %s20, 1
    %p80 = por %p78, %p79
    %p81 = scmp.ne.s32.totalorder %s72, %s73
    %p82 = scmp.eq.s32.totalorder %s20, 0
    %p83 = por %p81, %p82
    %p84 = scmp.ne.s32.totalorder %s72, %s73
    %p85 = scmp.eq.s32.totalorder %s21, 1
    %p86 = por %p84, %p85
    %p88 = scmp.ne.s32.totalorder %s73, %s87
    %p89 = scmp.eq.s32.totalorder %s21, 0
    %p90 = por %p88, %p89
    %s92 = sadd.s32 %s91, 1
    %p95 = scmp.eq.s32.totalorder %s15, 1
    %p96 = scmp.ne.s32.totalorder %s91, %s93
    %p97 = scmp.eq.s32.totalorder %s15, 0
    %p98 = por %p96, %p97
    %p99 = scmp.ne.s32.totalorder %s91, %s93
    %p100 = scmp.eq.s32.totalorder %s20, 1
    %p101 = por %p99, %p100
    %p102 = scmp.ne.s32.totalorder %s93, %s94
    %p103 = scmp.eq.s32.totalorder %s20, 0
    %p104 = por %p102, %p103
    %p105 = scmp.ne.s32.totalorder %s93, %s94
    %p106 = scmp.eq.s32.totalorder %s21, 1
    %p107 = por %p105, %p106
    %p109 = scmp.ne.s32.totalorder %s94, %s108
    %p110 = scmp.eq.s32.totalorder %s21, 0
    %p111 = por %p109, %p110
    %s113 = sadd.s32 %s112, 1
    %p116 = scmp.eq.s32.totalorder %s15, 1
    %p117 = scmp.ne.s32.totalorder %s112, %s114
    %p118 = scmp.eq.s32.totalorder %s15, 0
    %p119 = por %p117, %p118
    %p120 = scmp.ne.s32.totalorder %s112, %s114
    %p121 = scmp.eq.s32.totalorder %s20, 1
    %p122 = por %p120, %p121
    %p123 = scmp.ne.s32.totalorder %s114, %s115
    %p124 = scmp.eq.s32.totalorder %s20, 0
    %p125 = por %p123, %p124
    %p126 = scmp.ne.s32.totalorder %s114, %s115
    %p127 = scmp.eq.s32.totalorder %s21, 1
    %p128 = por %p126, %p127
    %p130 = scmp.ne.s32.totalorder %s115, %s129
    %p131 = scmp.eq.s32.totalorder %s21, 0
    %p132 = por %p130, %p131
    %s134 = sadd.s32 %s133, 1
    %p137 = scmp.eq.s32.totalorder %s15, 1
    %p138 = scmp.ne.s32.totalorder %s133, %s135
    %p139 = scmp.eq.s32.totalorder %s15, 0
    %p140 = por %p138, %p139
    %p141 = scmp.ne.s32.totalorder %s133, %s135
    %p142 = scmp.eq.s32.totalorder %s20, 1
    %p143 = por %p141, %p142
    %p144 = scmp.ne.s32.totalorder %s135, %s136
    %p145 = scmp.eq.s32.totalorder %s20, 0
    %p146 = por %p144, %p145
    %p147 = scmp.ne.s32.totalorder %s135, %s136
    %p148 = scmp.eq.s32.totalorder %s21, 1
    %p149 = por %p147, %p148
    %p151 = scmp.ne.s32.totalorder %s136, %s150
    %p152 = scmp.eq.s32.totalorder %s21, 0
    %p153 = por %p151, %p152
    %s155 = sadd.s32 %s154, 1
    %p158 = scmp.eq.s32.totalorder %s15, 1
    %p159 = scmp.ne.s32.totalorder %s154, %s156
    %p160 = scmp.eq.s32.totalorder %s15, 0
    %p161 = por %p159, %p160
    %p162 = scmp.ne.s32.totalorder %s154, %s156
    %p163 = scmp.eq.s32.totalorder %s20, 1
    %p164 = por %p162, %p163
    %p165 = scmp.ne.s32.totalorder %s156, %s157
    %p166 = scmp.eq.s32.totalorder %s20, 0
    %p167 = por %p165, %p166
    %p168 = scmp.ne.s32.totalorder %s156, %s157
    %p169 = scmp.eq.s32.totalorder %s21, 1
    %p170 = por %p168, %p169
    %p172 = scmp.ne.s32.totalorder %s157, %s171
    %p173 = scmp.eq.s32.totalorder %s21, 0
    %p174 = por %p172, %p173
    %s176 = sadd.s32 %s175, 1
    %p179 = scmp.eq.s32.totalorder %s15, 1
    %p180 = scmp.ne.s32.totalorder %s175, %s177
    %p181 = scmp.eq.s32.totalorder %s15, 0
    %p182 = por %p180, %p181
    %p183 = scmp.ne.s32.totalorder %s175, %s177
    %p184 = scmp.eq.s32.totalorder %s20, 1
    %p185 = por %p183, %p184
    %p186 = scmp.ne.s32.totalorder %s177, %s178
    %p187 = scmp.eq.s32.totalorder %s20, 0
    %p188 = por %p186, %p187
    %p189 = scmp.ne.s32.totalorder %s177, %s178
    %p190 = scmp.eq.s32.totalorder %s21, 1
    %p191 = por %p189, %p190
    %p193 = scmp.ne.s32.totalorder %s178, %s192
    %p194 = scmp.eq.s32.totalorder %s21, 0
    %p195 = por %p193, %p194
    %s197 = sadd.s32 %s196, 1
    %p200 = scmp.eq.s32.totalorder %s15, 1
    %p201 = scmp.ne.s32.totalorder %s196, %s198
    %p202 = scmp.eq.s32.totalorder %s15, 0
    %p203 = por %p201, %p202
    %p204 = scmp.ne.s32.totalorder %s196, %s198
    %p205 = scmp.eq.s32.totalorder %s20, 1
    %p206 = por %p204, %p205
    %p207 = scmp.ne.s32.totalorder %s198, %s199
    %p208 = scmp.eq.s32.totalorder %s20, 0
    %p209 = por %p207, %p208
    %p210 = scmp.ne.s32.totalorder %s198, %s199
    %p211 = scmp.eq.s32.totalorder %s21, 1
    %p212 = por %p210, %p211
    %p214 = scmp.ne.s32.totalorder %s199, %s213
    %p215 = scmp.eq.s32.totalorder %s21, 0
    %p216 = por %p214, %p215
    %s217 = ssub.s32 %s15, %s22
    %p218 = scmp.eq.s32.totalorder %s217, 0
    %s220 = sadd.s32 %s219, 1
    %s221 = scalar_select %p218, %s219, %s220
    %p224 = pneg %p218
    %p225 = scmp.eq.s32.totalorder %s15, 1
    %p226 = por %p224, %p225
    %p227 = scmp.ne.s32.totalorder %s219, %s222
    %p228 = scmp.eq.s32.totalorder %s15, 0
    %p229 = por %p227, %p228
    %p230 = scmp.ne.s32.totalorder %s219, %s222
    %p231 = scmp.eq.s32.totalorder %s20, 1
    %p232 = por %p230, %p231
    %p233 = scmp.ne.s32.totalorder %s222, %s223
    %p234 = scmp.eq.s32.totalorder %s20, 0
    %p235 = por %p233, %p234
    %p236 = scmp.ne.s32.totalorder %s222, %s223
    %p237 = scmp.eq.s32.totalorder %s21, 1
    %p238 = por %p236, %p237
    %p240 = scmp.ne.s32.totalorder %s223, %s239
    %p241 = scmp.eq.s32.totalorder %s21, 0
    %p242 = por %p240, %p241
    %p243 = scmp.le.s32.totalorder 1, %s15
    %p244 = scmp.lt.s32.totalorder %s15, 3
    %p245 = pnand %p243, %p244
    %p246 = pneg %p245
    // Predicated region
    $region9: #{tpu_custom_call.1} parent=5 // pred_check
      _
    $region10: #{tpu_custom_call.1} parent=5 // pred_check_branch
      %248 = sbr.rel (%p245) target = $region12
    $region11: #{tpu_custom_call.1} parent=5 // pred_region
      %s249 = ssub.s32 %s15, 1
      // Predicated region
      $region13: #{tpu_custom_call.1} parent=11 // pred_check
        %p250 = pneg %p62
      $region14: #{tpu_custom_call.1} parent=11 // pred_check_branch
        %252 = sbr.rel (%p250) target = $region16
      $region15: #{tpu_custom_call.1} parent=11 // pred_region
        _
      $region16: #{tpu_custom_call.1} parent=11 // pred_fallthru
        _
      // Predicated region
      $region17: #{tpu_custom_call.1} parent=11 // pred_check
        %p253 = pneg %p83
      $region18: #{tpu_custom_call.1} parent=11 // pred_check_branch
        %255 = sbr.rel (%p253) target = $region20
      $region19: #{tpu_custom_call.1} parent=11 // pred_region
        _
      $region20: #{tpu_custom_call.1} parent=11 // pred_fallthru
        _
      // Predicated region
      $region21: #{tpu_custom_call.1} parent=11 // pred_check
        %p256 = pneg %p104
      $region22: #{tpu_custom_call.1} parent=11 // pred_check_branch
        %258 = sbr.rel (%p256) target = $region24
      $region23: #{tpu_custom_call.1} parent=11 // pred_region
        _
      $region24: #{tpu_custom_call.1} parent=11 // pred_fallthru
        _
      // Predicated region
      $region25: #{tpu_custom_call.1} parent=11 // pred_check
        %p259 = pneg %p125
      $region26: #{tpu_custom_call.1} parent=11 // pred_check_branch
        %261 = sbr.rel (%p259) target = $region28
      $region27: #{tpu_custom_call.1} parent=11 // pred_region
        _
      $region28: #{tpu_custom_call.1} parent=11 // pred_fallthru
        _
      // Predicated region
      $region29: #{tpu_custom_call.1} parent=11 // pred_check
        %p262 = pneg %p146
      $region30: #{tpu_custom_call.1} parent=11 // pred_check_branch
        %264 = sbr.rel (%p262) target = $region32
      $region31: #{tpu_custom_call.1} parent=11 // pred_region
        _
      $region32: #{tpu_custom_call.1} parent=11 // pred_fallthru
        _
      // Predicated region
      $region33: #{tpu_custom_call.1} parent=11 // pred_check
        %p265 = pneg %p167
      $region34: #{tpu_custom_call.1} parent=11 // pred_check_branch
        %267 = sbr.rel (%p265) target = $region36
      $region35: #{tpu_custom_call.1} parent=11 // pred_region
        _
      $region36: #{tpu_custom_call.1} parent=11 // pred_fallthru
        _
      // Predicated region
      $region37: #{tpu_custom_call.1} parent=11 // pred_check
        %p268 = pneg %p188
      $region38: #{tpu_custom_call.1} parent=11 // pred_check_branch
        %270 = sbr.rel (%p268) target = $region40
      $region39: #{tpu_custom_call.1} parent=11 // pred_region
        _
      $region40: #{tpu_custom_call.1} parent=11 // pred_fallthru
        _
      // Predicated region
      $region41: #{tpu_custom_call.1} parent=11 // pred_check
        %p271 = pneg %p209
      $region42: #{tpu_custom_call.1} parent=11 // pred_check_branch
        %273 = sbr.rel (%p271) target = $region44
      $region43: #{tpu_custom_call.1} parent=11 // pred_region
        _
      $region44: #{tpu_custom_call.1} parent=11 // pred_fallthru
        _
    $region12: #{tpu_custom_call.1} parent=5 // pred_fallthru
      _
    %p274 = scmp.lt.s32.totalorder %s15, 2
    // Predicated region
    $region45: #{tpu_custom_call.1} parent=5 // pred_check
      %p275 = pneg %p274
    $region46: #{tpu_custom_call.1} parent=5 // pred_check_branch
      %277 = sbr.rel (%p275) target = $region48
    $region47: #{tpu_custom_call.1} parent=5 // pred_region
      // Predicated region
      $region49: #{tpu_custom_call.1} parent=47 // pred_check
        %p278 = pneg %p35
      $region50: #{tpu_custom_call.1} parent=47 // pred_check_branch
        %280 = sbr.rel (%p278) target = $region52
      $region51: #{tpu_custom_call.1} parent=47 // pred_region
        %s281 = smul.u32 2, %s15
        %p282 = scmp.lt.s32.totalorder %s281, 3
        %s283 = scalar_select %p282, %s281, 3
        %s284 = smul.addr %s283, 8
        %s285 = scalar_lea.vmem %s0, %s284
        %s286 = smul.u32 2, %s15
      $region52: #{tpu_custom_call.1} parent=47 // pred_fallthru
        _
    $region48: #{tpu_custom_call.1} parent=5 // pred_fallthru
      _
    %p287 = scmp.le.s32.totalorder 1, %s15
    %p288 = scmp.lt.s32.totalorder %s15, 3
    %p289 = pnand %p287, %p288
    %p290 = pneg %p289
    // Predicated region
    $region53: #{tpu_custom_call.1} parent=5 // pred_check
      _
    $region54: #{tpu_custom_call.1} parent=5 // pred_check_branch
      %292 = sbr.rel (%p289) target = $region56
    $region55: #{tpu_custom_call.1} parent=5 // pred_region
      %s293 = ssub.s32 %s15, 1
      %s294 = smul.u32 2, %s20
      %p295 = scmp.lt.s32.totalorder %s294, 3
      %s296 = scalar_select %p295, %s294, 3
      %s297 = smul.addr %s296, 8
      %s298 = scalar_lea.vmem %s0, %s297
      %p299 = pneg %p41
      %p300 = pneg %p38
      %p301 = pneg %p62
      %p302 = pneg %p59
      %p303 = pneg %p83
      %p304 = pneg %p80
      %p305 = pneg %p104
      %p306 = pneg %p101
      %p307 = pneg %p125
      %p308 = pneg %p122
      %p309 = pneg %p146
      %p310 = pneg %p143
      %p311 = pneg %p167
      %p312 = pneg %p164
      %p313 = pneg %p188
      %p314 = pneg %p185
      %p315 = pneg %p209
      %p316 = pneg %p206
      %p317 = pneg %p235
      %p318 = pneg %p232
      %s319 = smul.u32 2, %s20
      %p320 = scmp.lt.s32.totalorder %s319, 3
      %s321 = scalar_select %p320, %s319, 3
      %s322 = smul.addr %s321, 8
      %s323 = scalar_lea.vmem %s9, %s322
      %s324 = smul.u32 2, %s20
      %p325 = scmp.lt.s32.totalorder %s324, 3
      %s326 = scalar_select %p325, %s324, 3
      %s327 = smul.addr %s326, 8
      %s328 = scalar_lea.vmem %s0, %s327
      %s329 = smul.u32 2, %s20
      %s330 = smul.u32 2, %s20
      %p331 = scmp.lt.s32.totalorder %s330, 3
      %s332 = scalar_select %p331, %s330, 3
      %s333 = smul.addr %s332, 8
      %s334 = scalar_lea.vmem %s9, %s333
      %s335 = smul.u32 2, %s20
      %v336 = vld [vmem:[%s328] sm:$0xff]
      %v337 = vld [vmem:[%s328 + $0x8] sm:$0xff]
      %v338 = vld [vmem:[%s1] sm:$0x3]
      %v339 = vld [vmem:[%s2] sm:$0x1]
      %341 = vset.pattern.permute.xlu0 0
      %342 = vperm.xlu0 %341, %v336
      %v343 = vpop.permute.xlu0 %342
      %346 = vset.pattern.permute.xlu0 0
      %347 = vperm.xlu0 %346, %v337
      %v348 = vpop.permute.xlu0 %347
      %v350 = vlaneseq
      %v351 = vshrl.u32 %v350, 7
      %v352 = vsub.s32 0, %v351
      %v353 = vrot.slane %v338, %v352
      %v354 = vmul.f32 %v343, %v353
      %v355 = vmul.f32 %v348, %v353
      %v357 = vlaneseq
      %v358 = vshrl.u32 %v357, 7
      %v359 = vsub.s32 0, %v358
      %v360 = vrot.slane %v339, %v359
      %v362 = vadd.f32 %v360, %v354
      %v363 = vadd.f32 %v360, %v355
      %364 = vset.pattern.permute.xlu0 1
      %365 = vperm.xlu0 %364, %v336
      %v366 = vpop.permute.xlu0 %365
      %368 = vset.pattern.permute.xlu0 1
      %369 = vperm.xlu0 %368, %v337
      %v370 = vpop.permute.xlu0 %369
      %v372 = vlaneseq
      %v373 = vshrl.u32 %v372, 7
      %v374 = vsub.s32 1, %v373
      %v375 = vrot.slane %v338, %v374
      %v376 = vmul.f32 %v366, %v375
      %v377 = vmul.f32 %v370, %v375
      %v378 = vadd.f32 %v362, %v376
      %v379 = vadd.f32 %v363, %v377
      %v380 = vand.u32 2147483647, %v378
      %vm381 = vcmp.le.f32.partialorder %v380, 0.7853982
      %vm382 = vcmp.lt.s32.totalorder %v378, 0
      %v383 = vand.u32 %v378, 2139095040
      %v384 = vshrl.u32 %v383, 23
      %v385 = vsub.s32 %v384, 127
      %v386 = vand.u32 2147483647, %v378
      %v387 = vand.u32 %v386, 8388607
      %v388 = vor.u32 %v387, 8388608
      %v389 = vsub.s32 0, %v388
      %v390 = vadd.s32 %v385, 1
      %vm391 = vcmp.gt.s32.totalorder %v390, 0
      %v392 = vsel %vm391, %v390, 0
      %v393 = vshrl.u32 %v392, 5
      %v394 = vand.u32 %v392, 31
      %v395 = vsub.s32 32, %v394
      %v396 = vshrl.u32 683565275, %v395
      %v397 = vshll.u32 683565275, %v394
      %v398 = vshrl.u32 2475754826, %v395
      %v399 = vor.u32 %v397, %v398
      %v400 = vshll.u32 2475754826, %v394
      %v401 = vshrl.u32 2131351028, %v395
      %v402 = vor.u32 %v400, %v401
      %v403 = vshll.u32 2131351028, %v394
      %v404 = vshrl.u32 2102212464, %v395
      %v405 = vor.u32 %v403, %v404
      %v406 = vshll.u32 2102212464, %v394
      %v407 = vshrl.u32 920167782, %v395
      %v408 = vor.u32 %v406, %v407
      %v409 = vshll.u32 920167782, %v394
      %v410 = vshrl.u32 1326507024, %v395
      %v411 = vor.u32 %v409, %v410
      %vm412 = vcmp.lt.s32.totalorder %v393, 1
      %vm413 = vcmp.lt.s32.totalorder %v393, 2
      %vm414 = vcmp.lt.s32.totalorder %v393, 3
      %vm415 = vcmp.lt.s32.totalorder %v393, 4
      %v416 = vsel %vm412, %v396, %v399
      %v417 = vsel %vm415, %v405, 2102212464
      %v418 = vsel %vm414, %v402, %v417
      %v419 = vsel %vm413, %v416, %v418
      %v420 = vsel %vm412, %v399, %v402
      %v421 = vsel %vm415, %v408, 920167782
      %v422 = vsel %vm414, %v405, %v421
      %v423 = vsel %vm413, %v420, %v422
      %v424 = vsel %vm412, %v402, %v405
      %v425 = vsel %vm415, %v411, 1326507024
      %v426 = vsel %vm414, %v408, %v425
      %v427 = vsel %vm413, %v424, %v426
      %v428 = vshll.u32 %v388, 8
      %v429 = vmul.u32.u64.compose %v428, %v427
      %v430 = vextract.low.u32 %v429
      %v431 = vextract.high.u32 %v429
      %v432 = vmul.u32.u64.compose %v428, %v423
      %v433 = vextract.low.u32 %v432
      %v434 = vextract.high.u32 %v432
      %v435 = vmul.u32 %v428, %v419
      %v436 = vadd.s32 %v431, %v433
      %vm437 = vc.u32 %v431, %v433
      %v438 = vadd.s32 %v434, 1
      %v439 = vsel %vm437, %v438, %v434
      %v440 = vadd.s32 %v435, %v439
      %v441 = vadd.s32 %v440, 536870912
      %v442 = vshrl.u32 %v441, 30
      %v443 = vshll.u32 %v442, 30
      %v444 = vsub.s32 %v440, %v443
      %vm445 = vcmp.lt.s32.totalorder %v444, 0
      %v446 = vsub.s32 0, %v444
      %v447 = vsel %vm445, %v446, %v444
      %v448 = vclz %v447
      %v449 = vsub.s32 %v448, 2
      %vm450 = vcmp.gt.s32.totalorder 0, %v449
      %v451 = vsel %vm450, 0, %v449
      %v452 = vsub.s32 32, %v451
      %v453 = vshll.u32 %v444, %v451
      %v454 = vshrl.u32 %v436, %v452
      %v455 = vor.u32 %v453, %v454
      %v456 = vsub.s32 4294967266, %v451
      %v457 = vadd.s32 %v456, 127
      %v458 = vshll.u32 %v457, 23
      %v459 = vor.u32 4788187, %v458
      %v460 = vand.u32 2147483647, %v459
      %v462 = vcvt.s32.f32 %v455
      %v463 = vmul.f32 %v462, %v460
      %v464 = vxor.u32 %v463, 2147483648
      %v465 = vsel %vm382, %v464, %v463
      %v466 = vsub.s32 4, %v442
      %v467 = vsel %vm382, %v466, %v442
      %v468 = vsel %vm381, %v378, %v465
      %v469 = vsel %vm381, 0, %v467
      %v470 = vcosq.f32.pop %v468
      %v471 = vsinq.f32.pop %v468
      %vm472 = vweird.f32 %v378
      %v473 = vadd.s32 %v469, 3
      %v474 = vand.u32 %v473, 3
      %vm475 = vcmp.lt.s32.totalorder %v474, 2
      %vm476 = vcmp.eq.s32.totalorder %v474, 0
      %v477 = vxor.u32 %v471, 2147483648
      %v478 = vsel %vm476, %v470, %v477
      %vm479 = vcmp.eq.s32.totalorder %v474, 2
      %v480 = vxor.u32 %v470, 2147483648
      %v481 = vsel %vm479, %v480, %v471
      %v482 = vsel %vm475, %v478, %v481
      %v483 = vsel %vm472, nan, %v482
      %v484 = vand.u32 2147483647, %v379
      %vm485 = vcmp.le.f32.partialorder %v484, 0.7853982
      %vm486 = vcmp.lt.s32.totalorder %v379, 0
      %v487 = vand.u32 %v379, 2139095040
      %v488 = vshrl.u32 %v487, 23
      %v489 = vsub.s32 %v488, 127
      %v490 = vand.u32 2147483647, %v379
      %v491 = vand.u32 %v490, 8388607
      %v492 = vor.u32 %v491, 8388608
      %v493 = vsub.s32 0, %v492
      %v494 = vadd.s32 %v489, 1
      %vm495 = vcmp.gt.s32.totalorder %v494, 0
      %v496 = vsel %vm495, %v494, 0
      %v497 = vshrl.u32 %v496, 5
      %v498 = vand.u32 %v496, 31
      %v499 = vsub.s32 32, %v498
      %v500 = vshrl.u32 683565275, %v499
      %v501 = vshll.u32 683565275, %v498
      %v502 = vshrl.u32 2475754826, %v499
      %v503 = vor.u32 %v501, %v502
      %v504 = vshll.u32 2475754826, %v498
      %v505 = vshrl.u32 2131351028, %v499
      %v506 = vor.u32 %v504, %v505
      %v507 = vshll.u32 2131351028, %v498
      %v508 = vshrl.u32 2102212464, %v499
      %v509 = vor.u32 %v507, %v508
      %v510 = vshll.u32 2102212464, %v498
      %v511 = vshrl.u32 920167782, %v499
      %v512 = vor.u32 %v510, %v511
      %v513 = vshll.u32 920167782, %v498
      %v514 = vshrl.u32 1326507024, %v499
      %v515 = vor.u32 %v513, %v514
      %vm516 = vcmp.lt.s32.totalorder %v497, 1
      %vm517 = vcmp.lt.s32.totalorder %v497, 2
      %vm518 = vcmp.lt.s32.totalorder %v497, 3
      %vm519 = vcmp.lt.s32.totalorder %v497, 4
      %v520 = vsel %vm516, %v500, %v503
      %v521 = vsel %vm519, %v509, 2102212464
      %v522 = vsel %vm518, %v506, %v521
      %v523 = vsel %vm517, %v520, %v522
      %v524 = vsel %vm516, %v503, %v506
      %v525 = vsel %vm519, %v512, 920167782
      %v526 = vsel %vm518, %v509, %v525
      %v527 = vsel %vm517, %v524, %v526
      %v528 = vsel %vm516, %v506, %v509
      %v529 = vsel %vm519, %v515, 1326507024
      %v530 = vsel %vm518, %v512, %v529
      %v531 = vsel %vm517, %v528, %v530
      %v532 = vshll.u32 %v492, 8
      %v533 = vmul.u32.u64.compose %v532, %v531
      %v534 = vextract.low.u32 %v533
      %v535 = vextract.high.u32 %v533
      %v536 = vmul.u32.u64.compose %v532, %v527
      %v537 = vextract.low.u32 %v536
      %v538 = vextract.high.u32 %v536
      %v539 = vmul.u32 %v532, %v523
      %v540 = vadd.s32 %v535, %v537
      %vm541 = vc.u32 %v535, %v537
      %v542 = vadd.s32 %v538, 1
      %v543 = vsel %vm541, %v542, %v538
      %v544 = vadd.s32 %v539, %v543
      %v545 = vadd.s32 %v544, 536870912
      %v546 = vshrl.u32 %v545, 30
      %v547 = vshll.u32 %v546, 30
      %v548 = vsub.s32 %v544, %v547
      %vm549 = vcmp.lt.s32.totalorder %v548, 0
      %v550 = vsub.s32 0, %v548
      %v551 = vsel %vm549, %v550, %v548
      %v552 = vclz %v551
      %v553 = vsub.s32 %v552, 2
      %vm554 = vcmp.gt.s32.totalorder 0, %v553
      %v555 = vsel %vm554, 0, %v553
      %v556 = vsub.s32 32, %v555
      %v557 = vshll.u32 %v548, %v555
      %v558 = vshrl.u32 %v540, %v556
      %v559 = vor.u32 %v557, %v558
      %v560 = vsub.s32 4294967266, %v555
      %v561 = vadd.s32 %v560, 127
      %v562 = vshll.u32 %v561, 23
      %v563 = vor.u32 4788187, %v562
      %v564 = vand.u32 2147483647, %v563
      %v566 = vcvt.s32.f32 %v559
      %v567 = vmul.f32 %v566, %v564
      %v568 = vxor.u32 %v567, 2147483648
      %v569 = vsel %vm486, %v568, %v567
      %v570 = vsub.s32 4, %v546
      %v571 = vsel %vm486, %v570, %v546
      %v572 = vsel %vm485, %v379, %v569
      %v573 = vsel %vm485, 0, %v571
      %v574 = vcosq.f32.pop %v572
      %v575 = vsinq.f32.pop %v572
      %vm576 = vweird.f32 %v379
      %v577 = vadd.s32 %v573, 3
      %v578 = vand.u32 %v577, 3
      %vm579 = vcmp.lt.s32.totalorder %v578, 2
      %vm580 = vcmp.eq.s32.totalorder %v578, 0
      %v581 = vxor.u32 %v575, 2147483648
      %v582 = vsel %vm580, %v574, %v581
      %vm583 = vcmp.eq.s32.totalorder %v578, 2
      %v584 = vxor.u32 %v574, 2147483648
      %v585 = vsel %vm583, %v584, %v575
      %v586 = vsel %vm579, %v582, %v585
      %v587 = vsel %vm576, nan, %v586
      %v588 = vld [vmem:[%s3] sm:$0xff]
      %v589 = vld [vmem:[%s3 + $0x8] sm:$0xff]
      %v590 = vld [vmem:[%s3 + $0x10] sm:$0xff]
      %v591 = vld [vmem:[%s3 + $0x18] sm:$0xff]
      %v592 = vld [vmem:[%s4] sm:$0x1]
      %v594 = vlaneseq
      %v595 = vshrl.u32 %v594, 7
      %v596 = vsub.s32 0, %v595
      %v597 = vrot.slane %v592, %v596
      %vm599 = vcmask 261120
      %v601 = vsel %vm599, %v483, 0
      %v604 = vsel %vm599, %v587, 0
      %606 = vmatprep.subr.mxu0 0.0
      %607 = vmatpush1.msra.mxu0 %v588
      %608 = vmatprep.subr.mxu0 0.0
      %609 = vmatpush1.msra.mxu0 %v589
      %610 = vmatprep.subr.mxu0 0.0
      %611 = vmatpush1.msra.mxu0 %v590
      %612 = vmatprep.subr.mxu0 0.0
      %613 = vmatpush1.msra.mxu0 %v591
      %614 = vmatprep.subr.mxu0 0.0
      %615 = vmatpush1.msra.mxu0 0.0
      %616 = vmatprep.subr.mxu0 0.0
      %617 = vmatpush1.msra.mxu0 0.0
      %618 = vmatprep.subr.mxu0 0.0
      %619 = vmatpush1.msra.mxu0 0.0
      %620 = vmatprep.subr.mxu0 0.0
      %621 = vmatpush1.msra.mxu0 0.0
      %622 = vmatprep.subr.mxu0 0.0
      %623 = vmatpush1.msra.mxu0 0.0
      %624 = vmatprep.subr.mxu0 0.0
      %625 = vmatpush1.msra.mxu0 0.0
      %626 = vmatprep.subr.mxu0 0.0
      %627 = vmatpush1.msra.mxu0 0.0
      %628 = vmatprep.subr.mxu0 0.0
      %629 = vmatpush1.msra.mxu0 0.0
      %630 = vmatprep.subr.mxu0 0.0
      %631 = vmatpush1.msra.mxu0 0.0
      %632 = vmatprep.subr.mxu0 0.0
      %633 = vmatpush1.msra.mxu0 0.0
      %634 = vmatprep.subr.mxu0 0.0
      %635 = vmatpush1.msra.mxu0 0.0
      %636 = vmatprep.subr.mxu0 0.0
      %637 = vmatpush1.msra.mxu0 0.0
      %638 = vmatprep.subr.mxu0 0.0
      %639 = vmatpush1.msra.mxu0 0.0
      %640 = vmatprep.subr.mxu0 0.0
      %641 = vmatpush1.msra.mxu0 0.0
      %642 = vmatprep.subr.mxu0 0.0
      %643 = vmatpush1.msra.mxu0 0.0
      %644 = vmatprep.subr.mxu0 0.0
      %645 = vmatpush1.msra.mxu0 0.0
      %646 = vmatprep.subr.mxu0 0.0
      %647 = vmatpush1.msra.mxu0 0.0
      %648 = vmatprep.subr.mxu0 0.0
      %649 = vmatpush1.msra.mxu0 0.0
      %650 = vmatprep.subr.mxu0 0.0
      %651 = vmatpush1.msra.mxu0 0.0
      %652 = vmatprep.subr.mxu0 0.0
      %653 = vmatpush1.msra.mxu0 0.0
      %654 = vmatprep.subr.mxu0 0.0
      %655 = vmatpush1.msra.mxu0 0.0
      %656 = vmatprep.subr.mxu0 0.0
      %657 = vmatpush1.msra.mxu0 0.0
      %658 = vmatprep.subr.mxu0 0.0
      %659 = vmatpush1.msra.mxu0 0.0
      %660 = vmatprep.subr.mxu0 0.0
      %661 = vmatpush1.msra.mxu0 0.0
      %662 = vmatprep.subr.mxu0 0.0
      %663 = vmatpush1.msra.mxu0 0.0
      %664 = vmatprep.subr.mxu0 0.0
      %665 = vmatpush1.msra.mxu0 0.0
      %666 = vmatprep.subr.mxu0 0.0
      %667 = vmatpush1.msra.mxu0 0.0
      %668 = vmatprep.subr.mxu0 0.0
      %669 = vmatpush1.msra.mxu0 0.0
      %670 = vmatprep.mubr.f32.mxu0 0.0
      %671 = vmatmul.mubr.f32.gmra.mrb[0].mxu0 %v601
      %v672 = vpop.f32.mrb[0].mxu0
      %v673 = vadd.f32 %v597, %v672
      %v674 = vpop.f32.mrb[0].mxu0
      %675 = vmatprep.mubr.f32.mxu0 0.0
      %676 = vmatmul.mubr.f32.gmra.mrb[0].mxu0 %v604
      %v677 = vpop.f32.mrb[0].mxu0
      %v678 = vadd.f32 %v597, %v677
      %v679 = vpop.f32.mrb[0].mxu0
      %680 = vdwg.mxu0
      %v681 = vand.u32 2147483647, %v673
      %vm682 = vcmp.le.f32.partialorder %v681, 0.7853982
      %vm683 = vcmp.lt.s32.totalorder %v673, 0
      %v684 = vand.u32 %v673, 2139095040
      %v685 = vshrl.u32 %v684, 23
      %v686 = vsub.s32 %v685, 127
      %v687 = vand.u32 2147483647, %v673
      %v688 = vand.u32 %v687, 8388607
      %v689 = vor.u32 %v688, 8388608
      %v690 = vsub.s32 0, %v689
      %v691 = vadd.s32 %v686, 1
      %vm692 = vcmp.gt.s32.totalorder %v691, 0
      %v693 = vsel %vm692, %v691, 0
      %v694 = vshrl.u32 %v693, 5
      %v695 = vand.u32 %v693, 31
      %v696 = vsub.s32 32, %v695
      %v697 = vshrl.u32 683565275, %v696
      %v698 = vshll.u32 683565275, %v695
      %v699 = vshrl.u32 2475754826, %v696
      %v700 = vor.u32 %v698, %v699
      %v701 = vshll.u32 2475754826, %v695
      %v702 = vshrl.u32 2131351028, %v696
      %v703 = vor.u32 %v701, %v702
      %v704 = vshll.u32 2131351028, %v695
      %v705 = vshrl.u32 2102212464, %v696
      %v706 = vor.u32 %v704, %v705
      %v707 = vshll.u32 2102212464, %v695
      %v708 = vshrl.u32 920167782, %v696
      %v709 = vor.u32 %v707, %v708
      %v710 = vshll.u32 920167782, %v695
      %v711 = vshrl.u32 1326507024, %v696
      %v712 = vor.u32 %v710, %v711
      %vm713 = vcmp.lt.s32.totalorder %v694, 1
      %vm714 = vcmp.lt.s32.totalorder %v694, 2
      %vm715 = vcmp.lt.s32.totalorder %v694, 3
      %vm716 = vcmp.lt.s32.totalorder %v694, 4
      %v717 = vsel %vm713, %v697, %v700
      %v718 = vsel %vm716, %v706, 2102212464
      %v719 = vsel %vm715, %v703, %v718
      %v720 = vsel %vm714, %v717, %v719
      %v721 = vsel %vm713, %v700, %v703
      %v722 = vsel %vm716, %v709, 920167782
      %v723 = vsel %vm715, %v706, %v722
      %v724 = vsel %vm714, %v721, %v723
      %v725 = vsel %vm713, %v703, %v706
      %v726 = vsel %vm716, %v712, 1326507024
      %v727 = vsel %vm715, %v709, %v726
      %v728 = vsel %vm714, %v725, %v727
      %v729 = vshll.u32 %v689, 8
      %v730 = vmul.u32.u64.compose %v729, %v728
      %v731 = vextract.low.u32 %v730
      %v732 = vextract.high.u32 %v730
      %v733 = vmul.u32.u64.compose %v729, %v724
      %v734 = vextract.low.u32 %v733
      %v735 = vextract.high.u32 %v733
      %v736 = vmul.u32 %v729, %v720
      %v737 = vadd.s32 %v732, %v734
      %vm738 = vc.u32 %v732, %v734
      %v739 = vadd.s32 %v735, 1
      %v740 = vsel %vm738, %v739, %v735
      %v741 = vadd.s32 %v736, %v740
      %v742 = vadd.s32 %v741, 536870912
      %v743 = vshrl.u32 %v742, 30
      %v744 = vshll.u32 %v743, 30
      %v745 = vsub.s32 %v741, %v744
      %vm746 = vcmp.lt.s32.totalorder %v745, 0
      %v747 = vsub.s32 0, %v745
      %v748 = vsel %vm746, %v747, %v745
      %v749 = vclz %v748
      %v750 = vsub.s32 %v749, 2
      %vm751 = vcmp.gt.s32.totalorder 0, %v750
      %v752 = vsel %vm751, 0, %v750
      %v753 = vsub.s32 32, %v752
      %v754 = vshll.u32 %v745, %v752
      %v755 = vshrl.u32 %v737, %v753
      %v756 = vor.u32 %v754, %v755
      %v757 = vsub.s32 4294967266, %v752
      %v758 = vadd.s32 %v757, 127
      %v759 = vshll.u32 %v758, 23
      %v760 = vor.u32 4788187, %v759
      %v761 = vand.u32 2147483647, %v760
      %v763 = vcvt.s32.f32 %v756
      %v764 = vmul.f32 %v763, %v761
      %v765 = vxor.u32 %v764, 2147483648
      %v766 = vsel %vm683, %v765, %v764
      %v767 = vsub.s32 4, %v743
      %v768 = vsel %vm683, %v767, %v743
      %v769 = vsel %vm682, %v673, %v766
      %v770 = vsel %vm682, 0, %v768
      %v771 = vcosq.f32.pop %v769
      %v772 = vsinq.f32.pop %v769
      %vm773 = vweird.f32 %v673
      %v774 = vadd.s32 %v770, 3
      %v775 = vand.u32 %v774, 3
      %vm776 = vcmp.lt.s32.totalorder %v775, 2
      %vm777 = vcmp.eq.s32.totalorder %v775, 0
      %v778 = vxor.u32 %v772, 2147483648
      %v779 = vsel %vm777, %v771, %v778
      %vm780 = vcmp.eq.s32.totalorder %v775, 2
      %v781 = vxor.u32 %v771, 2147483648
      %v782 = vsel %vm780, %v781, %v772
      %v783 = vsel %vm776, %v779, %v782
      %v784 = vsel %vm773, nan, %v783
      %v785 = vand.u32 2147483647, %v678
      %vm786 = vcmp.le.f32.partialorder %v785, 0.7853982
      %vm787 = vcmp.lt.s32.totalorder %v678, 0
      %v788 = vand.u32 %v678, 2139095040
      %v789 = vshrl.u32 %v788, 23
      %v790 = vsub.s32 %v789, 127
      %v791 = vand.u32 2147483647, %v678
      %v792 = vand.u32 %v791, 8388607
      %v793 = vor.u32 %v792, 8388608
      %v794 = vsub.s32 0, %v793
      %v795 = vadd.s32 %v790, 1
      %vm796 = vcmp.gt.s32.totalorder %v795, 0
      %v797 = vsel %vm796, %v795, 0
      %v798 = vshrl.u32 %v797, 5
      %v799 = vand.u32 %v797, 31
      %v800 = vsub.s32 32, %v799
      %v801 = vshrl.u32 683565275, %v800
      %v802 = vshll.u32 683565275, %v799
      %v803 = vshrl.u32 2475754826, %v800
      %v804 = vor.u32 %v802, %v803
      %v805 = vshll.u32 2475754826, %v799
      %v806 = vshrl.u32 2131351028, %v800
      %v807 = vor.u32 %v805, %v806
      %v808 = vshll.u32 2131351028, %v799
      %v809 = vshrl.u32 2102212464, %v800
      %v810 = vor.u32 %v808, %v809
      %v811 = vshll.u32 2102212464, %v799
      %v812 = vshrl.u32 920167782, %v800
      %v813 = vor.u32 %v811, %v812
      %v814 = vshll.u32 920167782, %v799
      %v815 = vshrl.u32 1326507024, %v800
      %v816 = vor.u32 %v814, %v815
      %vm817 = vcmp.lt.s32.totalorder %v798, 1
      %vm818 = vcmp.lt.s32.totalorder %v798, 2
      %vm819 = vcmp.lt.s32.totalorder %v798, 3
      %vm820 = vcmp.lt.s32.totalorder %v798, 4
      %v821 = vsel %vm817, %v801, %v804
      %v822 = vsel %vm820, %v810, 2102212464
      %v823 = vsel %vm819, %v807, %v822
      %v824 = vsel %vm818, %v821, %v823
      %v825 = vsel %vm817, %v804, %v807
      %v826 = vsel %vm820, %v813, 920167782
      %v827 = vsel %vm819, %v810, %v826
      %v828 = vsel %vm818, %v825, %v827
      %v829 = vsel %vm817, %v807, %v810
      %v830 = vsel %vm820, %v816, 1326507024
      %v831 = vsel %vm819, %v813, %v830
      %v832 = vsel %vm818, %v829, %v831
      %v833 = vshll.u32 %v793, 8
      %v834 = vmul.u32.u64.compose %v833, %v832
      %v835 = vextract.low.u32 %v834
      %v836 = vextract.high.u32 %v834
      %v837 = vmul.u32.u64.compose %v833, %v828
      %v838 = vextract.low.u32 %v837
      %v839 = vextract.high.u32 %v837
      %v840 = vmul.u32 %v833, %v824
      %v841 = vadd.s32 %v836, %v838
      %vm842 = vc.u32 %v836, %v838
      %v843 = vadd.s32 %v839, 1
      %v844 = vsel %vm842, %v843, %v839
      %v845 = vadd.s32 %v840, %v844
      %v846 = vadd.s32 %v845, 536870912
      %v847 = vshrl.u32 %v846, 30
      %v848 = vshll.u32 %v847, 30
      %v849 = vsub.s32 %v845, %v848
      %vm850 = vcmp.lt.s32.totalorder %v849, 0
      %v851 = vsub.s32 0, %v849
      %v852 = vsel %vm850, %v851, %v849
      %v853 = vclz %v852
      %v854 = vsub.s32 %v853, 2
      %vm855 = vcmp.gt.s32.totalorder 0, %v854
      %v856 = vsel %vm855, 0, %v854
      %v857 = vsub.s32 32, %v856
      %v858 = vshll.u32 %v849, %v856
      %v859 = vshrl.u32 %v841, %v857
      %v860 = vor.u32 %v858, %v859
      %v861 = vsub.s32 4294967266, %v856
      %v862 = vadd.s32 %v861, 127
      %v863 = vshll.u32 %v862, 23
      %v864 = vor.u32 4788187, %v863
      %v865 = vand.u32 2147483647, %v864
      %v867 = vcvt.s32.f32 %v860
      %v868 = vmul.f32 %v867, %v865
      %v869 = vxor.u32 %v868, 2147483648
      %v870 = vsel %vm787, %v869, %v868
      %v871 = vsub.s32 4, %v847
      %v872 = vsel %vm787, %v871, %v847
      %v873 = vsel %vm786, %v678, %v870
      %v874 = vsel %vm786, 0, %v872
      %v875 = vcosq.f32.pop %v873
      %v876 = vsinq.f32.pop %v873
      %vm877 = vweird.f32 %v678
      %v878 = vadd.s32 %v874, 3
      %v879 = vand.u32 %v878, 3
      %vm880 = vcmp.lt.s32.totalorder %v879, 2
      %vm881 = vcmp.eq.s32.totalorder %v879, 0
      %v882 = vxor.u32 %v876, 2147483648
      %v883 = vsel %vm881, %v875, %v882
      %vm884 = vcmp.eq.s32.totalorder %v879, 2
      %v885 = vxor.u32 %v875, 2147483648
      %v886 = vsel %vm884, %v885, %v876
      %v887 = vsel %vm880, %v883, %v886
      %v888 = vsel %vm877, nan, %v887
      %v889 = vld [vmem:[%s5] sm:$0xff]
      %v890 = vld [vmem:[%s5 + $0x8] sm:$0xff]
      %v891 = vld [vmem:[%s5 + $0x10] sm:$0xff]
      %v892 = vld [vmem:[%s5 + $0x18] sm:$0xff]
      %v893 = vld [vmem:[%s6] sm:$0x1]
      %v895 = vlaneseq
      %v896 = vshrl.u32 %v895, 7
      %v897 = vsub.s32 0, %v896
      %v898 = vrot.slane %v893, %v897
      %v901 = vsel %vm599, %v784, 0
      %v904 = vsel %vm599, %v888, 0
      %906 = vmatprep.subr.mxu0 0.0
      %907 = vmatpush1.msra.mxu0 %v889
      %908 = vmatprep.subr.mxu0 0.0
      %909 = vmatpush1.msra.mxu0 %v890
      %910 = vmatprep.subr.mxu0 0.0
      %911 = vmatpush1.msra.mxu0 %v891
      %912 = vmatprep.subr.mxu0 0.0
      %913 = vmatpush1.msra.mxu0 %v892
      %914 = vmatprep.subr.mxu0 0.0
      %915 = vmatpush1.msra.mxu0 0.0
      %916 = vmatprep.subr.mxu0 0.0
      %917 = vmatpush1.msra.mxu0 0.0
      %918 = vmatprep.subr.mxu0 0.0
      %919 = vmatpush1.msra.mxu0 0.0
      %920 = vmatprep.subr.mxu0 0.0
      %921 = vmatpush1.msra.mxu0 0.0
      %922 = vmatprep.subr.mxu0 0.0
      %923 = vmatpush1.msra.mxu0 0.0
      %924 = vmatprep.subr.mxu0 0.0
      %925 = vmatpush1.msra.mxu0 0.0
      %926 = vmatprep.subr.mxu0 0.0
      %927 = vmatpush1.msra.mxu0 0.0
      %928 = vmatprep.subr.mxu0 0.0
      %929 = vmatpush1.msra.mxu0 0.0
      %930 = vmatprep.subr.mxu0 0.0
      %931 = vmatpush1.msra.mxu0 0.0
      %932 = vmatprep.subr.mxu0 0.0
      %933 = vmatpush1.msra.mxu0 0.0
      %934 = vmatprep.subr.mxu0 0.0
      %935 = vmatpush1.msra.mxu0 0.0
      %936 = vmatprep.subr.mxu0 0.0
      %937 = vmatpush1.msra.mxu0 0.0
      %938 = vmatprep.subr.mxu0 0.0
      %939 = vmatpush1.msra.mxu0 0.0
      %940 = vmatprep.subr.mxu0 0.0
      %941 = vmatpush1.msra.mxu0 0.0
      %942 = vmatprep.subr.mxu0 0.0
      %943 = vmatpush1.msra.mxu0 0.0
      %944 = vmatprep.subr.mxu0 0.0
      %945 = vmatpush1.msra.mxu0 0.0
      %946 = vmatprep.subr.mxu0 0.0
      %947 = vmatpush1.msra.mxu0 0.0
      %948 = vmatprep.subr.mxu0 0.0
      %949 = vmatpush1.msra.mxu0 0.0
      %950 = vmatprep.subr.mxu0 0.0
      %951 = vmatpush1.msra.mxu0 0.0
      %952 = vmatprep.subr.mxu0 0.0
      %953 = vmatpush1.msra.mxu0 0.0
      %954 = vmatprep.subr.mxu0 0.0
      %955 = vmatpush1.msra.mxu0 0.0
      %956 = vmatprep.subr.mxu0 0.0
      %957 = vmatpush1.msra.mxu0 0.0
      %958 = vmatprep.subr.mxu0 0.0
      %959 = vmatpush1.msra.mxu0 0.0
      %960 = vmatprep.subr.mxu0 0.0
      %961 = vmatpush1.msra.mxu0 0.0
      %962 = vmatprep.subr.mxu0 0.0
      %963 = vmatpush1.msra.mxu0 0.0
      %964 = vmatprep.subr.mxu0 0.0
      %965 = vmatpush1.msra.mxu0 0.0
      %966 = vmatprep.subr.mxu0 0.0
      %967 = vmatpush1.msra.mxu0 0.0
      %968 = vmatprep.subr.mxu0 0.0
      %969 = vmatpush1.msra.mxu0 0.0
      %970 = vmatprep.mubr.f32.mxu0 0.0
      %971 = vmatmul.mubr.f32.gmra.mrb[0].mxu0 %v901
      %v972 = vpop.f32.mrb[0].mxu0
      %v973 = vadd.f32 %v898, %v972
      %v974 = vpop.f32.mrb[0].mxu0
      %975 = vmatprep.mubr.f32.mxu0 0.0
      %976 = vmatmul.mubr.f32.gmra.mrb[0].mxu0 %v904
      %v977 = vpop.f32.mrb[0].mxu0
      %v978 = vadd.f32 %v898, %v977
      %v979 = vpop.f32.mrb[0].mxu0
      %980 = vdwg.mxu0
      %v981 = vand.u32 2147483647, %v973
      %vm982 = vcmp.le.f32.partialorder %v981, 0.7853982
      %vm983 = vcmp.lt.s32.totalorder %v973, 0
      %v984 = vand.u32 %v973, 2139095040
      %v985 = vshrl.u32 %v984, 23
      %v986 = vsub.s32 %v985, 127
      %v987 = vand.u32 2147483647, %v973
      %v988 = vand.u32 %v987, 8388607
      %v989 = vor.u32 %v988, 8388608
      %v990 = vsub.s32 0, %v989
      %v991 = vadd.s32 %v986, 1
      %vm992 = vcmp.gt.s32.totalorder %v991, 0
      %v993 = vsel %vm992, %v991, 0
      %v994 = vshrl.u32 %v993, 5
      %v995 = vand.u32 %v993, 31
      %v996 = vsub.s32 32, %v995
      %v997 = vshrl.u32 683565275, %v996
      %v998 = vshll.u32 683565275, %v995
      %v999 = vshrl.u32 2475754826, %v996
      %v1000 = vor.u32 %v998, %v999
      %v1001 = vshll.u32 2475754826, %v995
      %v1002 = vshrl.u32 2131351028, %v996
      %v1003 = vor.u32 %v1001, %v1002
      %v1004 = vshll.u32 2131351028, %v995
      %v1005 = vshrl.u32 2102212464, %v996
      %v1006 = vor.u32 %v1004, %v1005
      %v1007 = vshll.u32 2102212464, %v995
      %v1008 = vshrl.u32 920167782, %v996
      %v1009 = vor.u32 %v1007, %v1008
      %v1010 = vshll.u32 920167782, %v995
      %v1011 = vshrl.u32 1326507024, %v996
      %v1012 = vor.u32 %v1010, %v1011
      %vm1013 = vcmp.lt.s32.totalorder %v994, 1
      %vm1014 = vcmp.lt.s32.totalorder %v994, 2
      %vm1015 = vcmp.lt.s32.totalorder %v994, 3
      %vm1016 = vcmp.lt.s32.totalorder %v994, 4
      %v1017 = vsel %vm1013, %v997, %v1000
      %v1018 = vsel %vm1016, %v1006, 2102212464
      %v1019 = vsel %vm1015, %v1003, %v1018
      %v1020 = vsel %vm1014, %v1017, %v1019
      %v1021 = vsel %vm1013, %v1000, %v1003
      %v1022 = vsel %vm1016, %v1009, 920167782
      %v1023 = vsel %vm1015, %v1006, %v1022
      %v1024 = vsel %vm1014, %v1021, %v1023
      %v1025 = vsel %vm1013, %v1003, %v1006
      %v1026 = vsel %vm1016, %v1012, 1326507024
      %v1027 = vsel %vm1015, %v1009, %v1026
      %v1028 = vsel %vm1014, %v1025, %v1027
      %v1029 = vshll.u32 %v989, 8
      %v1030 = vmul.u32.u64.compose %v1029, %v1028
      %v1031 = vextract.low.u32 %v1030
      %v1032 = vextract.high.u32 %v1030
      %v1033 = vmul.u32.u64.compose %v1029, %v1024
      %v1034 = vextract.low.u32 %v1033
      %v1035 = vextract.high.u32 %v1033
      %v1036 = vmul.u32 %v1029, %v1020
      %v1037 = vadd.s32 %v1032, %v1034
      %vm1038 = vc.u32 %v1032, %v1034
      %v1039 = vadd.s32 %v1035, 1
      %v1040 = vsel %vm1038, %v1039, %v1035
      %v1041 = vadd.s32 %v1036, %v1040
      %v1042 = vadd.s32 %v1041, 536870912
      %v1043 = vshrl.u32 %v1042, 30
      %v1044 = vshll.u32 %v1043, 30
      %v1045 = vsub.s32 %v1041, %v1044
      %vm1046 = vcmp.lt.s32.totalorder %v1045, 0
      %v1047 = vsub.s32 0, %v1045
      %v1048 = vsel %vm1046, %v1047, %v1045
      %v1049 = vclz %v1048
      %v1050 = vsub.s32 %v1049, 2
      %vm1051 = vcmp.gt.s32.totalorder 0, %v1050
      %v1052 = vsel %vm1051, 0, %v1050
      %v1053 = vsub.s32 32, %v1052
      %v1054 = vshll.u32 %v1045, %v1052
      %v1055 = vshrl.u32 %v1037, %v1053
      %v1056 = vor.u32 %v1054, %v1055
      %v1057 = vsub.s32 4294967266, %v1052
      %v1058 = vadd.s32 %v1057, 127
      %v1059 = vshll.u32 %v1058, 23
      %v1060 = vor.u32 4788187, %v1059
      %v1061 = vand.u32 2147483647, %v1060
      %v1063 = vcvt.s32.f32 %v1056
      %v1064 = vmul.f32 %v1063, %v1061
      %v1065 = vxor.u32 %v1064, 2147483648
      %v1066 = vsel %vm983, %v1065, %v1064
      %v1067 = vsub.s32 4, %v1043
      %v1068 = vsel %vm983, %v1067, %v1043
      %v1069 = vsel %vm982, %v973, %v1066
      %v1070 = vsel %vm982, 0, %v1068
      %v1071 = vcosq.f32.pop %v1069
      %v1072 = vsinq.f32.pop %v1069
      %vm1073 = vweird.f32 %v973
      %v1074 = vadd.s32 %v1070, 3
      %v1075 = vand.u32 %v1074, 3
      %vm1076 = vcmp.lt.s32.totalorder %v1075, 2
      %vm1077 = vcmp.eq.s32.totalorder %v1075, 0
      %v1078 = vxor.u32 %v1072, 2147483648
      %v1079 = vsel %vm1077, %v1071, %v1078
      %vm1080 = vcmp.eq.s32.totalorder %v1075, 2
      %v1081 = vxor.u32 %v1071, 2147483648
      %v1082 = vsel %vm1080, %v1081, %v1072
      %v1083 = vsel %vm1076, %v1079, %v1082
      %v1084 = vsel %vm1073, nan, %v1083
      %v1085 = vand.u32 2147483647, %v978
      %vm1086 = vcmp.le.f32.partialorder %v1085, 0.7853982
      %vm1087 = vcmp.lt.s32.totalorder %v978, 0
      %v1088 = vand.u32 %v978, 2139095040
      %v1089 = vshrl.u32 %v1088, 23
      %v1090 = vsub.s32 %v1089, 127
      %v1091 = vand.u32 2147483647, %v978
      %v1092 = vand.u32 %v1091, 8388607
      %v1093 = vor.u32 %v1092, 8388608
      %v1094 = vsub.s32 0, %v1093
      %v1095 = vadd.s32 %v1090, 1
      %vm1096 = vcmp.gt.s32.totalorder %v1095, 0
      %v1097 = vsel %vm1096, %v1095, 0
      %v1098 = vshrl.u32 %v1097, 5
      %v1099 = vand.u32 %v1097, 31
      %v1100 = vsub.s32 32, %v1099
      %v1101 = vshrl.u32 683565275, %v1100
      %v1102 = vshll.u32 683565275, %v1099
      %v1103 = vshrl.u32 2475754826, %v1100
      %v1104 = vor.u32 %v1102, %v1103
      %v1105 = vshll.u32 2475754826, %v1099
      %v1106 = vshrl.u32 2131351028, %v1100
      %v1107 = vor.u32 %v1105, %v1106
      %v1108 = vshll.u32 2131351028, %v1099
      %v1109 = vshrl.u32 2102212464, %v1100
      %v1110 = vor.u32 %v1108, %v1109
      %v1111 = vshll.u32 2102212464, %v1099
      %v1112 = vshrl.u32 920167782, %v1100
      %v1113 = vor.u32 %v1111, %v1112
      %v1114 = vshll.u32 920167782, %v1099
      %v1115 = vshrl.u32 1326507024, %v1100
      %v1116 = vor.u32 %v1114, %v1115
      %vm1117 = vcmp.lt.s32.totalorder %v1098, 1
      %vm1118 = vcmp.lt.s32.totalorder %v1098, 2
      %vm1119 = vcmp.lt.s32.totalorder %v1098, 3
      %vm1120 = vcmp.lt.s32.totalorder %v1098, 4
      %v1121 = vsel %vm1117, %v1101, %v1104
      %v1122 = vsel %vm1120, %v1110, 2102212464
      %v1123 = vsel %vm1119, %v1107, %v1122
      %v1124 = vsel %vm1118, %v1121, %v1123
      %v1125 = vsel %vm1117, %v1104, %v1107
      %v1126 = vsel %vm1120, %v1113, 920167782
      %v1127 = vsel %vm1119, %v1110, %v1126
      %v1128 = vsel %vm1118, %v1125, %v1127
      %v1129 = vsel %vm1117, %v1107, %v1110
      %v1130 = vsel %vm1120, %v1116, 1326507024
      %v1131 = vsel %vm1119, %v1113, %v1130
      %v1132 = vsel %vm1118, %v1129, %v1131
      %v1133 = vshll.u32 %v1093, 8
      %v1134 = vmul.u32.u64.compose %v1133, %v1132
      %v1135 = vextract.low.u32 %v1134
      %v1136 = vextract.high.u32 %v1134
      %v1137 = vmul.u32.u64.compose %v1133, %v1128
      %v1138 = vextract.low.u32 %v1137
      %v1139 = vextract.high.u32 %v1137
      %v1140 = vmul.u32 %v1133, %v1124
      %v1141 = vadd.s32 %v1136, %v1138
      %vm1142 = vc.u32 %v1136, %v1138
      %v1143 = vadd.s32 %v1139, 1
      %v1144 = vsel %vm1142, %v1143, %v1139
      %v1145 = vadd.s32 %v1140, %v1144
      %v1146 = vadd.s32 %v1145, 536870912
      %v1147 = vshrl.u32 %v1146, 30
      %v1148 = vshll.u32 %v1147, 30
      %v1149 = vsub.s32 %v1145, %v1148
      %vm1150 = vcmp.lt.s32.totalorder %v1149, 0
      %v1151 = vsub.s32 0, %v1149
      %v1152 = vsel %vm1150, %v1151, %v1149
      %v1153 = vclz %v1152
      %v1154 = vsub.s32 %v1153, 2
      %vm1155 = vcmp.gt.s32.totalorder 0, %v1154
      %v1156 = vsel %vm1155, 0, %v1154
      %v1157 = vsub.s32 32, %v1156
      %v1158 = vshll.u32 %v1149, %v1156
      %v1159 = vshrl.u32 %v1141, %v1157
      %v1160 = vor.u32 %v1158, %v1159
      %v1161 = vsub.s32 4294967266, %v1156
      %v1162 = vadd.s32 %v1161, 127
      %v1163 = vshll.u32 %v1162, 23
      %v1164 = vor.u32 4788187, %v1163
      %v1165 = vand.u32 2147483647, %v1164
      %v1167 = vcvt.s32.f32 %v1160
      %v1168 = vmul.f32 %v1167, %v1165
      %v1169 = vxor.u32 %v1168, 2147483648
      %v1170 = vsel %vm1087, %v1169, %v1168
      %v1171 = vsub.s32 4, %v1147
      %v1172 = vsel %vm1087, %v1171, %v1147
      %v1173 = vsel %vm1086, %v978, %v1170
      %v1174 = vsel %vm1086, 0, %v1172
      %v1175 = vcosq.f32.pop %v1173
      %v1176 = vsinq.f32.pop %v1173
      %vm1177 = vweird.f32 %v978
      %v1178 = vadd.s32 %v1174, 3
      %v1179 = vand.u32 %v1178, 3
      %vm1180 = vcmp.lt.s32.totalorder %v1179, 2
      %vm1181 = vcmp.eq.s32.totalorder %v1179, 0
      %v1182 = vxor.u32 %v1176, 2147483648
      %v1183 = vsel %vm1181, %v1175, %v1182
      %vm1184 = vcmp.eq.s32.totalorder %v1179, 2
      %v1185 = vxor.u32 %v1175, 2147483648
      %v1186 = vsel %vm1184, %v1185, %v1176
      %v1187 = vsel %vm1180, %v1183, %v1186
      %v1188 = vsel %vm1177, nan, %v1187
      %v1189 = vld [vmem:[%s7] sm:$0xff]
      %v1190 = vld [vmem:[%s7 + $0x8] sm:$0xff]
      %v1191 = vld [vmem:[%s7 + $0x10] sm:$0xff]
      %v1192 = vld [vmem:[%s7 + $0x18] sm:$0xff]
      %v1193 = vld [vmem:[%s8] sm:$0x1]
      %v1195 = vlaneseq
      %v1196 = vshrl.u32 %v1195, 7
      %v1197 = vsub.s32 0, %v1196
      %v1198 = vrot.slane %v1193, %v1197
      %v1201 = vsel %vm599, %v1084, 0
      %v1204 = vsel %vm599, %v1188, 0
      %1206 = vmatprep.subr.mxu0 0.0
      %1207 = vmatpush1.msra.mxu0 %v1189
      %1208 = vmatprep.subr.mxu0 0.0
      %1209 = vmatpush1.msra.mxu0 %v1190
      %1210 = vmatprep.subr.mxu0 0.0
      %1211 = vmatpush1.msra.mxu0 %v1191
      %1212 = vmatprep.subr.mxu0 0.0
      %1213 = vmatpush1.msra.mxu0 %v1192
      %1214 = vmatprep.subr.mxu0 0.0
      %1215 = vmatpush1.msra.mxu0 0.0
      %1216 = vmatprep.subr.mxu0 0.0
      %1217 = vmatpush1.msra.mxu0 0.0
      %1218 = vmatprep.subr.mxu0 0.0
      %1219 = vmatpush1.msra.mxu0 0.0
      %1220 = vmatprep.subr.mxu0 0.0
      %1221 = vmatpush1.msra.mxu0 0.0
      %1222 = vmatprep.subr.mxu0 0.0
      %1223 = vmatpush1.msra.mxu0 0.0
      %1224 = vmatprep.subr.mxu0 0.0
      %1225 = vmatpush1.msra.mxu0 0.0
      %1226 = vmatprep.subr.mxu0 0.0
      %1227 = vmatpush1.msra.mxu0 0.0
      %1228 = vmatprep.subr.mxu0 0.0
      %1229 = vmatpush1.msra.mxu0 0.0
      %1230 = vmatprep.subr.mxu0 0.0
      %1231 = vmatpush1.msra.mxu0 0.0
      %1232 = vmatprep.subr.mxu0 0.0
      %1233 = vmatpush1.msra.mxu0 0.0
      %1234 = vmatprep.subr.mxu0 0.0
      %1235 = vmatpush1.msra.mxu0 0.0
      %1236 = vmatprep.subr.mxu0 0.0
      %1237 = vmatpush1.msra.mxu0 0.0
      %1238 = vmatprep.subr.mxu0 0.0
      %1239 = vmatpush1.msra.mxu0 0.0
      %1240 = vmatprep.subr.mxu0 0.0
      %1241 = vmatpush1.msra.mxu0 0.0
      %1242 = vmatprep.subr.mxu0 0.0
      %1243 = vmatpush1.msra.mxu0 0.0
      %1244 = vmatprep.subr.mxu0 0.0
      %1245 = vmatpush1.msra.mxu0 0.0
      %1246 = vmatprep.subr.mxu0 0.0
      %1247 = vmatpush1.msra.mxu0 0.0
      %1248 = vmatprep.subr.mxu0 0.0
      %1249 = vmatpush1.msra.mxu0 0.0
      %1250 = vmatprep.subr.mxu0 0.0
      %1251 = vmatpush1.msra.mxu0 0.0
      %1252 = vmatprep.subr.mxu0 0.0
      %1253 = vmatpush1.msra.mxu0 0.0
      %1254 = vmatprep.subr.mxu0 0.0
      %1255 = vmatpush1.msra.mxu0 0.0
      %1256 = vmatprep.subr.mxu0 0.0
      %1257 = vmatpush1.msra.mxu0 0.0
      %1258 = vmatprep.subr.mxu0 0.0
      %1259 = vmatpush1.msra.mxu0 0.0
      %1260 = vmatprep.subr.mxu0 0.0
      %1261 = vmatpush1.msra.mxu0 0.0
      %1262 = vmatprep.subr.mxu0 0.0
      %1263 = vmatpush1.msra.mxu0 0.0
      %1264 = vmatprep.subr.mxu0 0.0
      %1265 = vmatpush1.msra.mxu0 0.0
      %1266 = vmatprep.subr.mxu0 0.0
      %1267 = vmatpush1.msra.mxu0 0.0
      %1268 = vmatprep.subr.mxu0 0.0
      %1269 = vmatpush1.msra.mxu0 0.0
      %1270 = vmatprep.mubr.f32.mxu0 0.0
      %1271 = vmatmul.mubr.f32.gmra.mrb[0].mxu0 %v1201
      %v1272 = vpop.f32.mrb[0].mxu0
      %v1273 = vadd.f32 %v1198, %v1272
      %v1274 = vpop.f32.mrb[0].mxu0
      %1275 = vmatprep.mubr.f32.mxu0 0.0
      %1276 = vmatmul.mubr.f32.gmra.mrb[0].mxu0 %v1204
      %v1277 = vpop.f32.mrb[0].mxu0
      %v1278 = vadd.f32 %v1198, %v1277
      %v1279 = vpop.f32.mrb[0].mxu0
      %1280 = vdwg.mxu0
      %vm1281 = vcmask 23552
      %1282 = vst.msk [vmem:[%s334] sm:$0xff] %vm1281, %v1273
      %1283 = vst.msk [vmem:[%s334 + $0x8] sm:$0xff] %vm1281, %v1278
      %s1284 = smul.u32 2, %s20
      %p1285 = scmp.lt.s32.totalorder %s1284, 3
      %s1286 = scalar_select %p1285, %s1284, 3
      %s1287 = smul.addr %s1286, 8
      %s1288 = scalar_lea.vmem %s9, %s1287
      // Predicated region
      $region57: #{tpu_custom_call.1} parent=55 // pred_check
        %p1289 = pneg %p232
      $region58: #{tpu_custom_call.1} parent=55 // pred_check_branch
        %1291 = sbr.rel (%p1289) target = $region60
      $region59: #{tpu_custom_call.1} parent=55 // pred_region
        %s1292 = smul.u32 2, %s20
      $region60: #{tpu_custom_call.1} parent=55 // pred_fallthru
        _
    $region56: #{tpu_custom_call.1} parent=5 // pred_fallthru
      _
    %p1293 = scmp.le.s32.totalorder 2, %s15
    // Predicated region
    $region61: #{tpu_custom_call.1} parent=5 // pred_check
      %p1294 = pneg %p1293
    $region62: #{tpu_custom_call.1} parent=5 // pred_check_branch
      %1296 = sbr.rel (%p1294) target = $region64
    $region63: #{tpu_custom_call.1} parent=5 // pred_region
      %s1297 = ssub.s32 %s15, 2
      // Predicated region
      $region65: #{tpu_custom_call.1} parent=63 // pred_check
        %p1298 = pneg %p238
      $region66: #{tpu_custom_call.1} parent=63 // pred_check_branch
        %1300 = sbr.rel (%p1298) target = $region68
      $region67: #{tpu_custom_call.1} parent=63 // pred_region
        %s1301 = smul.u32 2, %s21
        %p1302 = scmp.lt.s32.totalorder %s1301, 3
        %s1303 = scalar_select %p1302, %s1301, 3
        %s1304 = smul.addr %s1303, 8
        %s1305 = scalar_lea.vmem %s9, %s1304
      $region68: #{tpu_custom_call.1} parent=63 // pred_fallthru
        _
    $region64: #{tpu_custom_call.1} parent=5 // pred_fallthru
      _
  $region6: #{tpu_custom_call.1} parent=0 // loop_footer
    %s19 = sadd.s32 1, %s15
  $region7: #{tpu_custom_call.1} parent=0 // loop_footer_branch
    %14 = sbr.rel target = $region3
  $region8: #{tpu_custom_call.1} parent=0 // loop_exit
    _

</llo_original>
